<compile_context>
chip_gen: v5e
topology: v5e:2x2
jax: 0.10.0
libtpu: 0.0.40
codegen_flags: <defaults>
</compile_context>

<pallas_src>
from functools import partial

import jax
import jax.numpy as jnp
from jax.experimental import pallas as pl
from jax.experimental.pallas import tpu as pltpu

LANE = 128      # lane width: hidden feature dims padded to a multiple of this
SUBLANE = 8     # sublane width: batch tiles / thin feature dims padded to this


def _round_up(x, m):
    return ((x + m - 1) // m) * m


# ------------------------------ fused kernel ------------------------------- #

def _fused_resnet_kernel(y_ref, w_in_ref, b_in_ref, w_blk_ref, b_blk_ref,
                         w_out_ref, b_out_ref, o_ref, *, n_blocks):
    """One batch tile through the whole network; all weights resident in VMEM.

    Padded lanes are exactly zero everywhere: zero-padded weight rows/cols and
    zero-padded biases keep them at 0, and tanh(0) == 0, so the residual adds
    never leak padding into real lanes.
    """
    # Input layer: (tile_b, d_in=8) @ (8, d_hid=128)  — thin-K matmul.
    h = jnp.tanh(
        jnp.dot(y_ref[...], w_in_ref[...], preferred_element_type=jnp.float32)
        + b_in_ref[...]
    )
    for i in range(n_blocks):  # static unroll over residual blocks
        mid = jnp.tanh(
            jnp.dot(h, w_blk_ref[2 * i], preferred_element_type=jnp.float32)
            + b_blk_ref[2 * i]
        )
        h = jnp.tanh(
            jnp.dot(mid, w_blk_ref[2 * i + 1], preferred_element_type=jnp.float32)
            + b_blk_ref[2 * i + 1]
            + h
        )
    # Output layer: (tile_b, 128) @ (128, d_out=8)  — thin-N matmul, thin writeback.
    o_ref[...] = (
        jnp.dot(h, w_out_ref[...], preferred_element_type=jnp.float32)
        + b_out_ref[...]
    ).astype(o_ref.dtype)


# ------------------------- parameter initialization ------------------------ #

def _init_linear(key, in_dim, out_dim):
    """Mimic torch.nn.Linear default init: U(-1/sqrt(fan_in), 1/sqrt(fan_in)).
    Weight stored transposed: (in_dim, out_dim). Bias: (1, out_dim)."""
    kw, kb = jax.random.split(key)
    bound = 1.0 / jnp.sqrt(jnp.float32(in_dim))
    w = jax.random.uniform(kw, (in_dim, out_dim), jnp.float32, -bound, bound)
    b = jax.random.uniform(kb, (1, out_dim), jnp.float32, -bound, bound)
    return w, b


def init_resnet_params(key, input_dim, hidden_dims, output_dim):
    n_blocks = len(hidden_dims) - 1
    keys = jax.random.split(key, 2 + 2 * n_blocks)
    params = {"input": _init_linear(keys[0], input_dim, hidden_dims[0])}
    blocks, kidx = [], 1
    for i in range(n_blocks):
        w1, b1 = _init_linear(keys[kidx], hidden_dims[i], hidden_dims[i + 1]); kidx += 1
        w2, b2 = _init_linear(keys[kidx], hidden_dims[i + 1], hidden_dims[i]); kidx += 1
        blocks.append((w1, b1, w2, b2))
    params["blocks"] = blocks
    params["output"] = _init_linear(keys[kidx], hidden_dims[-1], output_dim)
    return params


def _pad2(a, rows, cols):
    """Zero-pad a 2-D array to (rows, cols)."""
    return jnp.zeros((rows, cols), a.dtype).at[: a.shape[0], : a.shape[1]].set(a)


def pack_params_for_kernel(params):
    """Zero-pad weights/biases (hidden dims to 128 lanes, input/output dims only to
    8) and concatenate the per-block weights/biases into two stacked arrays so the
    fused kernel indexes them with a static loop and the call has fewer DMA streams."""
    w_in, b_in = params["input"]
    w_out, b_out = params["output"]
    in_dim, hid = w_in.shape
    out_dim = w_out.shape[1]

    d_in = _round_up(in_dim, SUBLANE)    # thin K for the input layer (4 -> 8)
    d_hid = _round_up(hid, LANE)         # full MXU lanes for the hidden dims (32 -> 128)
    d_out = _round_up(out_dim, SUBLANE)  # thin output (4 -> 8): 16x less writeback than 128

    packed = {
        "dims": (in_dim, hid, out_dim, d_in, d_hid, d_out),
        "w_in": _pad2(w_in, d_in, d_hid),
        "b_in": _pad2(b_in, 1, d_hid),
        "w_out": _pad2(w_out, d_hid, d_out),
        "b_out": _pad2(b_out, 1, d_out),
    }
    ws, bs = [], []
    for (w1, b1, w2, b2) in params["blocks"]:
        ws.append(_pad2(w1, d_hid, d_hid)); bs.append(_pad2(b1, 1, d_hid))
        ws.append(_pad2(w2, d_hid, d_hid)); bs.append(_pad2(b2, 1, d_hid))
    packed["w_blk"] = jnp.stack(ws)   # (2*n_blocks, d_hid, d_hid): [w1_0, w2_0, w1_1, ...]
    packed["b_blk"] = jnp.stack(bs)   # (2*n_blocks, 1, d_hid)
    return packed


# ------------------------------- forward pass ------------------------------ #

def _choose_batch_tiling(batch, max_tile_b):
    bp = _round_up(batch, SUBLANE)
    tile = min(_round_up(max_tile_b, SUBLANE), bp)
    # Guarantee >= 2 grid steps whenever the batch allows it: lets
    # dimension_semantics=("parallel",) shard across v7x's two TensorCores and
    # gives the pipeline something to overlap (DMA of tile i+1 under compute of i).
    if bp // tile < 2 and bp >= 2 * SUBLANE:
        tile = _round_up(bp // 2, SUBLANE)
    bp = _round_up(bp, tile)
    return tile, bp


def resnet_forward(packed, t, y, *, max_tile_b=1024):
    """Neural-ODE vector field f(t, y); `t` is unused (matches the PyTorch forward)."""
    del t
    if y.ndim == 1:
        y = y[None, :]
    batch = y.shape[0]
    in_dim, hid, out_dim, d_in, d_hid, d_out = packed["dims"]
    n_blocks = packed["w_blk"].shape[0] // 2

    tile_b, batch_pad = _choose_batch_tiling(batch, max_tile_b)
    grid = (batch_pad // tile_b,)

    # Input streamed thin: (batch_pad, 8) instead of 128-lane padded.
    y_pad = jnp.zeros((batch_pad, d_in), jnp.float32).at[:batch, :in_dim].set(y)

    # Advisory cost estimate from the REAL (unpadded) dims.
    flops = 2 * batch * (in_dim * hid + 2 * n_blocks * hid * hid + hid * out_dim)
    transcendentals = batch * hid * (1 + 2 * n_blocks)
    param_bytes = 4 * (
        in_dim * hid + hid + 2 * n_blocks * (hid * hid + hid) + hid * out_dim + out_dim
    )
    bytes_accessed = param_bytes + 4 * batch * (in_dim + out_dim)

    # Weights/biases have a constant index_map across the grid -> single-buffer them.
    single = pl.Buffered(buffer_count=1)

    out_pad = pl.pallas_call(
        partial(_fused_resnet_kernel, n_blocks=n_blocks),
        out_shape=jax.ShapeDtypeStruct((batch_pad, d_out), jnp.float32),
        grid=grid,
        in_specs=[
            pl.BlockSpec((tile_b, d_in), lambda i: (i, 0)),               # y tile streams
            pl.BlockSpec((d_in, d_hid), lambda i: (0, 0),                 # weights resident
                         pipeline_mode=single),
            pl.BlockSpec((1, d_hid), lambda i: (0, 0), pipeline_mode=single),
            pl.BlockSpec((2 * n_blocks, d_hid, d_hid), lambda i: (0, 0, 0),
                         pipeline_mode=single),
            pl.BlockSpec((2 * n_blocks, 1, d_hid), lambda i: (0, 0, 0),
                         pipeline_mode=single),
            pl.BlockSpec((d_hid, d_out), lambda i: (0, 0), pipeline_mode=single),
            pl.BlockSpec((1, d_out), lambda i: (0, 0), pipeline_mode=single),
        ],
        out_specs=pl.BlockSpec((tile_b, d_out), lambda i: (i, 0)),
        compiler_params=pltpu.CompilerParams(
            dimension_semantics=("parallel",),
            # Explicit headroom so a tile_b sweep stays portable to v7x (64 MiB
            # physical VMEM, 32 MiB default scoped limit). Our footprint is ~2 MiB.
            vmem_limit_bytes=32 * 1024 * 1024,
        ),
        cost_estimate=pl.CostEstimate(
            flops=flops,
            transcendentals=transcendentals,
            bytes_accessed=bytes_accessed,
        ),
    )(
        y_pad,
        packed["w_in"], packed["b_in"],
        packed["w_blk"], packed["b_blk"],
        packed["w_out"], packed["b_out"],
    )
    return out_pad[:batch, :out_dim]


# ---------------------------------- main ----------------------------------- #

if __name__ == "__main__":
    input_dim = 4
    hidden_dims = [32, 32, 32]   # all equal: required for the residual shapes to match
    output_dim = 4
    batch = 256                  # -> tile_b=128, grid=(2,): both v7x TCs + pipelining

    root = jax.random.PRNGKey(0)
    k_params, k_y = jax.random.split(root)

    params = init_resnet_params(k_params, input_dim, hidden_dims, output_dim)
    packed = pack_params_for_kernel(params)

    y = jax.random.normal(k_y, (batch, input_dim), jnp.float32)
    t = jnp.float32(0.0)

    out = resnet_forward(packed, t, y)
    jax.block_until_ready(out)

    # pure-JAX reference of the same math (unpadded params)
    def ref_forward(params, y):
        w_in, b_in = params["input"]
        h = jnp.tanh(y @ w_in + b_in)
        for (w1, b1, w2, b2) in params["blocks"]:
            mid = jnp.tanh(h @ w1 + b1)
            h = jnp.tanh(mid @ w2 + b2 + h)
        w_out, b_out = params["output"]
        return h @ w_out + b_out

    ref = ref_forward(params, y)
    assert out.shape == (batch, output_dim)
    assert jnp.allclose(out, ref, atol=1e-5, rtol=1e-5)

    # also exercise the 1-D input path of forward(t, y)
    y1 = y[0]
    out1 = resnet_forward(packed, t, y1)
    jax.block_until_ready(out1)
    assert out1.shape == (1, output_dim)
    assert jnp.allclose(out1, ref_forward(params, y1[None, :]), atol=1e-5, rtol=1e-5)

    print("KERNEL_OK")
</pallas_src>

<mosaic_0001>
module attributes {stable_mosaic.version = 11 : i64} {
  func.func @_fused_resnet_kernel(%arg0: i32, %arg1: memref<128x8xf32, #tpu.memory_space<vmem>>, %arg2: memref<8x128xf32, #tpu.memory_space<vmem>>, %arg3: memref<1x128xf32, #tpu.memory_space<vmem>>, %arg4: memref<4x128x128xf32, #tpu.memory_space<vmem>>, %arg5: memref<4x1x128xf32, #tpu.memory_space<vmem>>, %arg6: memref<128x8xf32, #tpu.memory_space<vmem>>, %arg7: memref<1x8xf32, #tpu.memory_space<vmem>>, %arg8: memref<128x8xf32, #tpu.memory_space<vmem>>) attributes {dimension_semantics = [#tpu.dimension_semantics<parallel>], iteration_bounds = array<i64: 2>, scalar_prefetch = 0 : i64, scratch_operands = 0 : i64, tpu.core_type = #tpu.core_type<tc>, window_params = [{transform_indices = @transform_0, window_bounds = array<i64: 128, 8>}, {pipeline_mode = #tpu.pipeline_mode<synchronous>, transform_indices = @transform_1, window_bounds = array<i64: 8, 128>}, {pipeline_mode = #tpu.pipeline_mode<synchronous>, transform_indices = @transform_2, window_bounds = array<i64: 1, 128>}, {pipeline_mode = #tpu.pipeline_mode<synchronous>, transform_indices = @transform_3, window_bounds = array<i64: 4, 128, 128>}, {pipeline_mode = #tpu.pipeline_mode<synchronous>, transform_indices = @transform_4, window_bounds = array<i64: 4, 1, 128>}, {pipeline_mode = #tpu.pipeline_mode<synchronous>, transform_indices = @transform_5, window_bounds = array<i64: 128, 8>}, {pipeline_mode = #tpu.pipeline_mode<synchronous>, transform_indices = @transform_6, window_bounds = array<i64: 1, 8>}, {transform_indices = @transform_7, window_bounds = array<i64: 128, 8>}]} {
    %c0 = arith.constant 0 : index
    %c0_0 = arith.constant 0 : index
    %0 = vector.load %arg1[%c0, %c0_0] : memref<128x8xf32, #tpu.memory_space<vmem>>, vector<128x8xf32>
    %c0_1 = arith.constant 0 : index
    %c0_2 = arith.constant 0 : index
    %1 = vector.load %arg2[%c0_1, %c0_2] : memref<8x128xf32, #tpu.memory_space<vmem>>, vector<8x128xf32>
    %cst = arith.constant dense<0.000000e+00> : vector<128x128xf32>
    %2 = tpu.matmul %0, %1, %cst {dimension_numbers = #tpu.dot_dimension_numbers<[1], [0], [0], [1], [0, 0, 1, 1], [], []>} : vector<128x8xf32>, vector<8x128xf32>, vector<128x128xf32> -> vector<128x128xf32>
    %c0_3 = arith.constant 0 : index
    %c0_4 = arith.constant 0 : index
    %3 = vector.load %arg3[%c0_3, %c0_4] : memref<1x128xf32, #tpu.memory_space<vmem>>, vector<1x128xf32>
    %4 = vector.broadcast %3 : vector<1x128xf32> to vector<128x128xf32>
    %5 = arith.addf %2, %4 : vector<128x128xf32>
    %6 = math.tanh %5 : vector<128x128xf32>
    %c0_5 = arith.constant 0 : index
    %c0_6 = arith.constant 0 : index
    %c0_7 = arith.constant 0 : index
    %7 = vector.load %arg4[%c0_5, %c0_6, %c0_7] : memref<4x128x128xf32, #tpu.memory_space<vmem>>, vector<1x128x128xf32>
    %8 = vector.shape_cast %7 : vector<1x128x128xf32> to vector<128x128xf32>
    %cst_8 = arith.constant dense<0.000000e+00> : vector<128x128xf32>
    %9 = tpu.matmul %6, %8, %cst_8 {dimension_numbers = #tpu.dot_dimension_numbers<[1], [0], [0], [1], [0, 0, 1, 1], [], []>} : vector<128x128xf32>, vector<128x128xf32>, vector<128x128xf32> -> vector<128x128xf32>
    %c0_9 = arith.constant 0 : index
    %c0_10 = arith.constant 0 : index
    %c0_11 = arith.constant 0 : index
    %10 = vector.load %arg5[%c0_9, %c0_10, %c0_11] : memref<4x1x128xf32, #tpu.memory_space<vmem>>, vector<1x1x128xf32>
    %11 = vector.shape_cast %10 : vector<1x1x128xf32> to vector<1x128xf32>
    %12 = vector.broadcast %11 : vector<1x128xf32> to vector<128x128xf32>
    %13 = arith.addf %9, %12 : vector<128x128xf32>
    %14 = math.tanh %13 : vector<128x128xf32>
    %c1 = arith.constant 1 : index
    %c0_12 = arith.constant 0 : index
    %c0_13 = arith.constant 0 : index
    %15 = vector.load %arg4[%c1, %c0_12, %c0_13] : memref<4x128x128xf32, #tpu.memory_space<vmem>>, vector<1x128x128xf32>
    %16 = vector.shape_cast %15 : vector<1x128x128xf32> to vector<128x128xf32>
    %cst_14 = arith.constant dense<0.000000e+00> : vector<128x128xf32>
    %17 = tpu.matmul %14, %16, %cst_14 {dimension_numbers = #tpu.dot_dimension_numbers<[1], [0], [0], [1], [0, 0, 1, 1], [], []>} : vector<128x128xf32>, vector<128x128xf32>, vector<128x128xf32> -> vector<128x128xf32>
    %c1_15 = arith.constant 1 : index
    %c0_16 = arith.constant 0 : index
    %c0_17 = arith.constant 0 : index
    %18 = vector.load %arg5[%c1_15, %c0_16, %c0_17] : memref<4x1x128xf32, #tpu.memory_space<vmem>>, vector<1x1x128xf32>
    %19 = vector.shape_cast %18 : vector<1x1x128xf32> to vector<1x128xf32>
    %20 = vector.broadcast %19 : vector<1x128xf32> to vector<128x128xf32>
    %21 = arith.addf %17, %20 : vector<128x128xf32>
    %22 = arith.addf %21, %6 : vector<128x128xf32>
    %23 = math.tanh %22 : vector<128x128xf32>
    %c2 = arith.constant 2 : index
    %c0_18 = arith.constant 0 : index
    %c0_19 = arith.constant 0 : index
    %24 = vector.load %arg4[%c2, %c0_18, %c0_19] : memref<4x128x128xf32, #tpu.memory_space<vmem>>, vector<1x128x128xf32>
    %25 = vector.shape_cast %24 : vector<1x128x128xf32> to vector<128x128xf32>
    %cst_20 = arith.constant dense<0.000000e+00> : vector<128x128xf32>
    %26 = tpu.matmul %23, %25, %cst_20 {dimension_numbers = #tpu.dot_dimension_numbers<[1], [0], [0], [1], [0, 0, 1, 1], [], []>} : vector<128x128xf32>, vector<128x128xf32>, vector<128x128xf32> -> vector<128x128xf32>
    %c2_21 = arith.constant 2 : index
    %c0_22 = arith.constant 0 : index
    %c0_23 = arith.constant 0 : index
    %27 = vector.load %arg5[%c2_21, %c0_22, %c0_23] : memref<4x1x128xf32, #tpu.memory_space<vmem>>, vector<1x1x128xf32>
    %28 = vector.shape_cast %27 : vector<1x1x128xf32> to vector<1x128xf32>
    %29 = vector.broadcast %28 : vector<1x128xf32> to vector<128x128xf32>
    %30 = arith.addf %26, %29 : vector<128x128xf32>
    %31 = math.tanh %30 : vector<128x128xf32>
    %c3 = arith.constant 3 : index
    %c0_24 = arith.constant 0 : index
    %c0_25 = arith.constant 0 : index
    %32 = vector.load %arg4[%c3, %c0_24, %c0_25] : memref<4x128x128xf32, #tpu.memory_space<vmem>>, vector<1x128x128xf32>
    %33 = vector.shape_cast %32 : vector<1x128x128xf32> to vector<128x128xf32>
    %cst_26 = arith.constant dense<0.000000e+00> : vector<128x128xf32>
    %34 = tpu.matmul %31, %33, %cst_26 {dimension_numbers = #tpu.dot_dimension_numbers<[1], [0], [0], [1], [0, 0, 1, 1], [], []>} : vector<128x128xf32>, vector<128x128xf32>, vector<128x128xf32> -> vector<128x128xf32>
    %c3_27 = arith.constant 3 : index
    %c0_28 = arith.constant 0 : index
    %c0_29 = arith.constant 0 : index
    %35 = vector.load %arg5[%c3_27, %c0_28, %c0_29] : memref<4x1x128xf32, #tpu.memory_space<vmem>>, vector<1x1x128xf32>
    %36 = vector.shape_cast %35 : vector<1x1x128xf32> to vector<1x128xf32>
    %37 = vector.broadcast %36 : vector<1x128xf32> to vector<128x128xf32>
    %38 = arith.addf %34, %37 : vector<128x128xf32>
    %39 = arith.addf %38, %23 : vector<128x128xf32>
    %40 = math.tanh %39 : vector<128x128xf32>
    %c0_30 = arith.constant 0 : index
    %c0_31 = arith.constant 0 : index
    %41 = vector.load %arg6[%c0_30, %c0_31] : memref<128x8xf32, #tpu.memory_space<vmem>>, vector<128x8xf32>
    %cst_32 = arith.constant dense<0.000000e+00> : vector<128x8xf32>
    %42 = tpu.matmul %40, %41, %cst_32 {dimension_numbers = #tpu.dot_dimension_numbers<[1], [0], [0], [1], [0, 0, 1, 1], [], []>} : vector<128x128xf32>, vector<128x8xf32>, vector<128x8xf32> -> vector<128x8xf32>
    %c0_33 = arith.constant 0 : index
    %c0_34 = arith.constant 0 : index
    %43 = vector.load %arg7[%c0_33, %c0_34] : memref<1x8xf32, #tpu.memory_space<vmem>>, vector<1x8xf32>
    %44 = vector.broadcast %43 : vector<1x8xf32> to vector<128x8xf32>
    %45 = arith.addf %42, %44 : vector<128x8xf32>
    %c0_35 = arith.constant 0 : index
    %c0_36 = arith.constant 0 : index
    %46 = vector.load %arg8[%c0_35, %c0_36] : memref<128x8xf32, #tpu.memory_space<vmem>>, vector<128x8xf32>
    tpu.vector_store %arg8[%c0_35, %c0_36], %45 {strides = array<i32>} : memref<128x8xf32, #tpu.memory_space<vmem>>, vector<128x8xf32>,
    return
  }
  func.func @transform_0(%arg0: i32) -> (i32, i32) {
    %c0_i32 = arith.constant 0 : i32
    %c0_i32_0 = arith.constant 0 : i32
    return %arg0, %c0_i32 : i32, i32
  }
  func.func @transform_1(%arg0: i32) -> (i32, i32) {
    %c0_i32 = arith.constant 0 : i32
    %c0_i32_0 = arith.constant 0 : i32
    %c0_i32_1 = arith.constant 0 : i32
    return %c0_i32, %c0_i32_0 : i32, i32
  }
  func.func @transform_2(%arg0: i32) -> (i32, i32) {
    %c0_i32 = arith.constant 0 : i32
    %c0_i32_0 = arith.constant 0 : i32
    %c0_i32_1 = arith.constant 0 : i32
    return %c0_i32, %c0_i32_0 : i32, i32
  }
  func.func @transform_3(%arg0: i32) -> (i32, i32, i32) {
    %c0_i32 = arith.constant 0 : i32
    %c0_i32_0 = arith.constant 0 : i32
    %c0_i32_1 = arith.constant 0 : i32
    %c0_i32_2 = arith.constant 0 : i32
    return %c0_i32, %c0_i32_0, %c0_i32_1 : i32, i32, i32
  }
  func.func @transform_4(%arg0: i32) -> (i32, i32, i32) {
    %c0_i32 = arith.constant 0 : i32
    %c0_i32_0 = arith.constant 0 : i32
    %c0_i32_1 = arith.constant 0 : i32
    %c0_i32_2 = arith.constant 0 : i32
    return %c0_i32, %c0_i32_0, %c0_i32_1 : i32, i32, i32
  }
  func.func @transform_5(%arg0: i32) -> (i32, i32) {
    %c0_i32 = arith.constant 0 : i32
    %c0_i32_0 = arith.constant 0 : i32
    %c0_i32_1 = arith.constant 0 : i32
    return %c0_i32, %c0_i32_0 : i32, i32
  }
  func.func @transform_6(%arg0: i32) -> (i32, i32) {
    %c0_i32 = arith.constant 0 : i32
    %c0_i32_0 = arith.constant 0 : i32
    %c0_i32_1 = arith.constant 0 : i32
    return %c0_i32, %c0_i32_0 : i32, i32
  }
  func.func @transform_7(%arg0: i32) -> (i32, i32) {
    %c0_i32 = arith.constant 0 : i32
    %c0_i32_0 = arith.constant 0 : i32
    return %arg0, %c0_i32 : i32, i32
  }
}

</mosaic_0001>

<llo_original>
// kernel: tpu_custom_call.1
$region0: #{tpu_custom_call.1}
  #allocation0 [shape = 'u32[]', space=smem, size = 0x4, offset = 0x4, fixed_abs, tag = 'smem constant byte address 0x4 - core index']
  #allocation1 [shape = 'u32[72,128]{1,0:T(1,128)}', space=vmem, size = 0x9000, scoped, tag = 'internal scratch']
  %s0 = inlined_call_operand.vmem [shape: f32[256,8], index: 0, kind: input, shape index: {}]
  %s1 = inlined_call_operand.vmem [shape: f32[8,128], index: 1, kind: input, shape index: {}]
  %s2 = inlined_call_operand.vmem [shape: f32[1,128], index: 2, kind: input, shape index: {}]
  %s3 = inlined_call_operand.hbm [shape: f32[4,128,128], index: 3, kind: input, shape index: {}]
  %s4 = inlined_call_operand.vmem [shape: f32[4,1,128], index: 4, kind: input, shape index: {}]
  %s5 = inlined_call_operand.vmem [shape: f32[128,8], index: 5, kind: input, shape index: {}]
  %s6 = inlined_call_operand.vmem [shape: f32[1,8], index: 6, kind: input, shape index: {}]
  %s7 = inlined_call_operand.vmem [shape: f32[256,8], index: 7, kind: output, shape index: {}]
  %s8 = sld [smem:[#allocation0]]
  $region65: #{tpu_custom_call.1} parent=0
    _
  %s10 = ssub.s32 1, %s8
  %s11 = scalar_select 0, %s10, %s8
  $region1: #{tpu_custom_call.1} parent=0
    #allocation2 [shape = 'u8[262144]{0}', space=vmem, size = 0x40000, scoped, tag = 'input window, operand 3, single buffered']
    #allocation3 [shape = 's32[2]{0}', space=sflag, size = 0x8, scoped, tag = 'scoped memory for tpu_custom_call.1']
    %12 = vsyncpa [#allocation3], 0
    loop: start=0, step=1, limit=4
    $region2: #{tpu_custom_call.1} parent=1 // loop_pre_header
      _
    $region3: #{tpu_custom_call.1} parent=1 // loop_header
      %s14 = sphi 0, %s18
      %p15 = scmp.ge.s32.totalorder %s14, 4
      %s24 = sphi 0, %s26
      %s27 = sphi 0, %s24
      %s28 = sphi 0, %s27
      %s44 = sphi 0, %s28
      %s48 = sphi 0, %s48
      %s50 = sphi 0, %s48
      %s51 = sphi 0, %s50
      %s65 = sphi 0, %s51
      %s69 = sphi 0, %s69
      %s71 = sphi 0, %s69
      %s72 = sphi 0, %s71
      %s86 = sphi 0, %s72
      %s90 = sphi 0, %s90
      %s92 = sphi 0, %s90
      %s93 = sphi 0, %s92
      %s107 = sphi 0, %s93
      %s111 = sphi 0, %s111
      %s113 = sphi 0, %s111
      %s114 = sphi 0, %s113
      %s128 = sphi 0, %s114
      %s132 = sphi 0, %s132
      %s134 = sphi 0, %s132
      %s135 = sphi 0, %s134
      %s149 = sphi 0, %s135
      %s153 = sphi 0, %s153
      %s155 = sphi 0, %s153
      %s156 = sphi 0, %s155
      %s170 = sphi 0, %s156
      %s176 = sphi 0, %s178
      %s179 = sphi 0, %s176
      %s180 = sphi 0, %s179
      %s196 = sphi 0, %s180
    $region4: #{tpu_custom_call.1} parent=1 // loop_header_branch
      %17 = sbr.rel (%p15) target = $region8
    $region5: #{tpu_custom_call.1} parent=1 // loop_body
      %s19 = ssub.s32 %s14, 1
      %s20 = ssub.s32 %s14, 2
      %s21 = sadd.s32 %s14, 1
      %s22 = ssub.s32 %s14, %s21
      %p23 = scmp.eq.s32.totalorder %s22, 0
      %s25 = sadd.s32 %s24, 1
      %s26 = scalar_select %p23, %s24, %s25
      %p29 = pneg %p23
      %p30 = scmp.eq.s32.totalorder %s14, 1
      %p31 = por %p29, %p30
      %p32 = scmp.ne.s32.totalorder %s24, %s27
      %p33 = scmp.eq.s32.totalorder %s14, 0
      %p34 = por %p32, %p33
      %p35 = scmp.ne.s32.totalorder %s24, %s27
      %p36 = scmp.eq.s32.totalorder %s19, 1
      %p37 = por %p35, %p36
      %p38 = scmp.ne.s32.totalorder %s27, %s28
      %p39 = scmp.eq.s32.totalorder %s19, 0
      %p40 = por %p38, %p39
      %p41 = scmp.ne.s32.totalorder %s27, %s28
      %p42 = scmp.eq.s32.totalorder %s20, 1
      %p43 = por %p41, %p42
      %p45 = scmp.ne.s32.totalorder %s28, %s44
      %p46 = scmp.eq.s32.totalorder %s20, 0
      %p47 = por %p45, %p46
      %s49 = sadd.s32 %s48, 1
      %p52 = scmp.eq.s32.totalorder %s14, 1
      %p53 = scmp.ne.s32.totalorder %s48, %s50
      %p54 = scmp.eq.s32.totalorder %s14, 0
      %p55 = por %p53, %p54
      %p56 = scmp.ne.s32.totalorder %s48, %s50
      %p57 = scmp.eq.s32.totalorder %s19, 1
      %p58 = por %p56, %p57
      %p59 = scmp.ne.s32.totalorder %s50, %s51
      %p60 = scmp.eq.s32.totalorder %s19, 0
      %p61 = por %p59, %p60
      %p62 = scmp.ne.s32.totalorder %s50, %s51
      %p63 = scmp.eq.s32.totalorder %s20, 1
      %p64 = por %p62, %p63
      %p66 = scmp.ne.s32.totalorder %s51, %s65
      %p67 = scmp.eq.s32.totalorder %s20, 0
      %p68 = por %p66, %p67
      %s70 = sadd.s32 %s69, 1
      %p73 = scmp.eq.s32.totalorder %s14, 1
      %p74 = scmp.ne.s32.totalorder %s69, %s71
      %p75 = scmp.eq.s32.totalorder %s14, 0
      %p76 = por %p74, %p75
      %p77 = scmp.ne.s32.totalorder %s69, %s71
      %p78 = scmp.eq.s32.totalorder %s19, 1
      %p79 = por %p77, %p78
      %p80 = scmp.ne.s32.totalorder %s71, %s72
      %p81 = scmp.eq.s32.totalorder %s19, 0
      %p82 = por %p80, %p81
      %p83 = scmp.ne.s32.totalorder %s71, %s72
      %p84 = scmp.eq.s32.totalorder %s20, 1
      %p85 = por %p83, %p84
      %p87 = scmp.ne.s32.totalorder %s72, %s86
      %p88 = scmp.eq.s32.totalorder %s20, 0
      %p89 = por %p87, %p88
      %s91 = sadd.s32 %s90, 1
      %p94 = scmp.eq.s32.totalorder %s14, 1
      %p95 = scmp.ne.s32.totalorder %s90, %s92
      %p96 = scmp.eq.s32.totalorder %s14, 0
      %p97 = por %p95, %p96
      %p98 = scmp.ne.s32.totalorder %s90, %s92
      %p99 = scmp.eq.s32.totalorder %s19, 1
      %p100 = por %p98, %p99
      %p101 = scmp.ne.s32.totalorder %s92, %s93
      %p102 = scmp.eq.s32.totalorder %s19, 0
      %p103 = por %p101, %p102
      %p104 = scmp.ne.s32.totalorder %s92, %s93
      %p105 = scmp.eq.s32.totalorder %s20, 1
      %p106 = por %p104, %p105
      %p108 = scmp.ne.s32.totalorder %s93, %s107
      %p109 = scmp.eq.s32.totalorder %s20, 0
      %p110 = por %p108, %p109
      %s112 = sadd.s32 %s111, 1
      %p115 = scmp.eq.s32.totalorder %s14, 1
      %p116 = scmp.ne.s32.totalorder %s111, %s113
      %p117 = scmp.eq.s32.totalorder %s14, 0
      %p118 = por %p116, %p117
      %p119 = scmp.ne.s32.totalorder %s111, %s113
      %p120 = scmp.eq.s32.totalorder %s19, 1
      %p121 = por %p119, %p120
      %p122 = scmp.ne.s32.totalorder %s113, %s114
      %p123 = scmp.eq.s32.totalorder %s19, 0
      %p124 = por %p122, %p123
      %p125 = scmp.ne.s32.totalorder %s113, %s114
      %p126 = scmp.eq.s32.totalorder %s20, 1
      %p127 = por %p125, %p126
      %p129 = scmp.ne.s32.totalorder %s114, %s128
      %p130 = scmp.eq.s32.totalorder %s20, 0
      %p131 = por %p129, %p130
      %s133 = sadd.s32 %s132, 1
      %p136 = scmp.eq.s32.totalorder %s14, 1
      %p137 = scmp.ne.s32.totalorder %s132, %s134
      %p138 = scmp.eq.s32.totalorder %s14, 0
      %p139 = por %p137, %p138
      %p140 = scmp.ne.s32.totalorder %s132, %s134
      %p141 = scmp.eq.s32.totalorder %s19, 1
      %p142 = por %p140, %p141
      %p143 = scmp.ne.s32.totalorder %s134, %s135
      %p144 = scmp.eq.s32.totalorder %s19, 0
      %p145 = por %p143, %p144
      %p146 = scmp.ne.s32.totalorder %s134, %s135
      %p147 = scmp.eq.s32.totalorder %s20, 1
      %p148 = por %p146, %p147
      %p150 = scmp.ne.s32.totalorder %s135, %s149
      %p151 = scmp.eq.s32.totalorder %s20, 0
      %p152 = por %p150, %p151
      %s154 = sadd.s32 %s153, 1
      %p157 = scmp.eq.s32.totalorder %s14, 1
      %p158 = scmp.ne.s32.totalorder %s153, %s155
      %p159 = scmp.eq.s32.totalorder %s14, 0
      %p160 = por %p158, %p159
      %p161 = scmp.ne.s32.totalorder %s153, %s155
      %p162 = scmp.eq.s32.totalorder %s19, 1
      %p163 = por %p161, %p162
      %p164 = scmp.ne.s32.totalorder %s155, %s156
      %p165 = scmp.eq.s32.totalorder %s19, 0
      %p166 = por %p164, %p165
      %p167 = scmp.ne.s32.totalorder %s155, %s156
      %p168 = scmp.eq.s32.totalorder %s20, 1
      %p169 = por %p167, %p168
      %p171 = scmp.ne.s32.totalorder %s156, %s170
      %p172 = scmp.eq.s32.totalorder %s20, 0
      %p173 = por %p171, %p172
      %s174 = ssub.s32 %s14, %s21
      %p175 = scmp.eq.s32.totalorder %s174, 0
      %s177 = sadd.s32 %s176, 1
      %s178 = scalar_select %p175, %s176, %s177
      %p181 = pneg %p175
      %p182 = scmp.eq.s32.totalorder %s14, 1
      %p183 = por %p181, %p182
      %p184 = scmp.ne.s32.totalorder %s176, %s179
      %p185 = scmp.eq.s32.totalorder %s14, 0
      %p186 = por %p184, %p185
      %p187 = scmp.ne.s32.totalorder %s176, %s179
      %p188 = scmp.eq.s32.totalorder %s19, 1
      %p189 = por %p187, %p188
      %p190 = scmp.ne.s32.totalorder %s179, %s180
      %p191 = scmp.eq.s32.totalorder %s19, 0
      %p192 = por %p190, %p191
      %p193 = scmp.ne.s32.totalorder %s179, %s180
      %p194 = scmp.eq.s32.totalorder %s20, 1
      %p195 = por %p193, %p194
      %p197 = scmp.ne.s32.totalorder %s180, %s196
      %p198 = scmp.eq.s32.totalorder %s20, 0
      %p199 = por %p197, %p198
      %p200 = scmp.le.s32.totalorder 1, %s14
      %p201 = scmp.lt.s32.totalorder %s14, 3
      %p202 = pnand %p200, %p201
      %p203 = pneg %p202
      // Predicated region
      $region9: #{tpu_custom_call.1} parent=5 // pred_check
        _
      $region10: #{tpu_custom_call.1} parent=5 // pred_check_branch
        %205 = sbr.rel (%p202) target = $region12
      $region11: #{tpu_custom_call.1} parent=5 // pred_region
        %s206 = ssub.s32 %s14, 1
        // Predicated region
        $region13: #{tpu_custom_call.1} parent=11 // pred_check
          %p207 = pneg %p61
        $region14: #{tpu_custom_call.1} parent=11 // pred_check_branch
          %209 = sbr.rel (%p207) target = $region16
        $region15: #{tpu_custom_call.1} parent=11 // pred_region
          _
        $region16: #{tpu_custom_call.1} parent=11 // pred_fallthru
          _
        // Predicated region
        $region17: #{tpu_custom_call.1} parent=11 // pred_check
          %p210 = pneg %p82
        $region18: #{tpu_custom_call.1} parent=11 // pred_check_branch
          %212 = sbr.rel (%p210) target = $region20
        $region19: #{tpu_custom_call.1} parent=11 // pred_region
          _
        $region20: #{tpu_custom_call.1} parent=11 // pred_fallthru
          _
        // Predicated region
        $region21: #{tpu_custom_call.1} parent=11 // pred_check
          %p213 = pneg %p103
        $region22: #{tpu_custom_call.1} parent=11 // pred_check_branch
          %215 = sbr.rel (%p213) target = $region24
        $region23: #{tpu_custom_call.1} parent=11 // pred_region
          %217 = vsyncadd [#allocation3], 0
          %s218 = sshll.u32 %s3, 4
          %s219 = int_to_ptr.hbm [resolvable:$true] %s218
          %s220 = sshll.u32 [#allocation2], 4
          %s221 = int_to_ptr.vmem [resolvable:$true] %s220
          %226 = dma.hbm_to_vmem [thread:$0]  %s219, 8192, %s221, [#allocation3], 128, 128, 8
        $region24: #{tpu_custom_call.1} parent=11 // pred_fallthru
          _
        // Predicated region
        $region25: #{tpu_custom_call.1} parent=11 // pred_check
          %p227 = pneg %p124
        $region26: #{tpu_custom_call.1} parent=11 // pred_check_branch
          %229 = sbr.rel (%p227) target = $region28
        $region27: #{tpu_custom_call.1} parent=11 // pred_region
          _
        $region28: #{tpu_custom_call.1} parent=11 // pred_fallthru
          _
        // Predicated region
        $region29: #{tpu_custom_call.1} parent=11 // pred_check
          %p230 = pneg %p145
        $region30: #{tpu_custom_call.1} parent=11 // pred_check_branch
          %232 = sbr.rel (%p230) target = $region32
        $region31: #{tpu_custom_call.1} parent=11 // pred_region
          _
        $region32: #{tpu_custom_call.1} parent=11 // pred_fallthru
          _
        // Predicated region
        $region33: #{tpu_custom_call.1} parent=11 // pred_check
          %p233 = pneg %p166
        $region34: #{tpu_custom_call.1} parent=11 // pred_check_branch
          %235 = sbr.rel (%p233) target = $region36
        $region35: #{tpu_custom_call.1} parent=11 // pred_region
          _
        $region36: #{tpu_custom_call.1} parent=11 // pred_fallthru
          _
      $region12: #{tpu_custom_call.1} parent=5 // pred_fallthru
        _
      %p236 = scmp.lt.s32.totalorder %s14, 2
      // Predicated region
      $region37: #{tpu_custom_call.1} parent=5 // pred_check
        %p237 = pneg %p236
      $region38: #{tpu_custom_call.1} parent=5 // pred_check_branch
        %239 = sbr.rel (%p237) target = $region40
      $region39: #{tpu_custom_call.1} parent=5 // pred_region
        // Predicated region
        $region41: #{tpu_custom_call.1} parent=39 // pred_check
          %p240 = pneg %p34
        $region42: #{tpu_custom_call.1} parent=39 // pred_check_branch
          %242 = sbr.rel (%p240) target = $region44
        $region43: #{tpu_custom_call.1} parent=39 // pred_region
          %s243 = smul.u32 16, %s14
          %p244 = scmp.lt.s32.totalorder %s243, 31
          %s245 = scalar_select %p244, %s243, 31
          %s246 = smul.addr %s245, 8
          %s247 = scalar_lea.vmem %s0, %s246
          %s248 = smul.u32 16, %s14
        $region44: #{tpu_custom_call.1} parent=39 // pred_fallthru
          _
      $region40: #{tpu_custom_call.1} parent=5 // pred_fallthru
        _
      %p249 = scmp.le.s32.totalorder 1, %s14
      %p250 = scmp.lt.s32.totalorder %s14, 3
      %p251 = pnand %p249, %p250
      %p252 = pneg %p251
      // Predicated region
      $region45: #{tpu_custom_call.1} parent=5 // pred_check
        _
      $region46: #{tpu_custom_call.1} parent=5 // pred_check_branch
        %254 = sbr.rel (%p251) target = $region48
      $region47: #{tpu_custom_call.1} parent=5 // pred_region
        %s255 = ssub.s32 %s14, 1
        // Predicated region
        $region49: #{tpu_custom_call.1} parent=47 // pred_check
          %p256 = pneg %p103
        $region50: #{tpu_custom_call.1} parent=47 // pred_check_branch
          %258 = sbr.rel (%p256) target = $region52
        $region51: #{tpu_custom_call.1} parent=47 // pred_region
          %260 = dma.done [#allocation3], 8192
        $region52: #{tpu_custom_call.1} parent=47 // pred_fallthru
          _
        %s261 = smul.u32 16, %s19
        %p262 = scmp.lt.s32.totalorder %s261, 31
        %s263 = scalar_select %p262, %s261, 31
        %s264 = smul.addr %s263, 8
        %s265 = scalar_lea.vmem %s0, %s264
        %p266 = pneg %p40
        %p267 = pneg %p37
        %p268 = pneg %p61
        %p269 = pneg %p58
        %p270 = pneg %p82
        %p271 = pneg %p79
        %p272 = pneg %p103
        %p273 = pneg %p100
        %p274 = pneg %p124
        %p275 = pneg %p121
        %p276 = pneg %p145
        %p277 = pneg %p142
        %p278 = pneg %p166
        %p279 = pneg %p163
        %p280 = pneg %p192
        %p281 = pneg %p189
        %s282 = smul.u32 16, %s19
        %p283 = scmp.lt.s32.totalorder %s282, 31
        %s284 = scalar_select %p283, %s282, 31
        %s285 = smul.addr %s284, 8
        %s286 = scalar_lea.vmem %s7, %s285
        %s287 = smul.u32 16, %s19
        %p288 = scmp.lt.s32.totalorder %s287, 31
        %s289 = scalar_select %p288, %s287, 31
        %s290 = smul.addr %s289, 8
        %s291 = scalar_lea.vmem %s0, %s290
        %s292 = smul.u32 16, %s19
        %s293 = smul.u32 16, %s19
        %p294 = scmp.lt.s32.totalorder %s293, 31
        %s295 = scalar_select %p294, %s293, 31
        %s296 = smul.addr %s295, 8
        %s297 = scalar_lea.vmem %s7, %s296
        %s298 = smul.u32 16, %s19
        %v299 = vld [vmem:[%s291] sm:$0xff]
        %v300 = vld [vmem:[%s291 + $0x8] sm:$0xff]
        %v301 = vld [vmem:[%s291 + $0x10] sm:$0xff]
        %v302 = vld [vmem:[%s291 + $0x18] sm:$0xff]
        %v303 = vld [vmem:[%s291 + $0x20] sm:$0xff]
        %v304 = vld [vmem:[%s291 + $0x28] sm:$0xff]
        %v305 = vld [vmem:[%s291 + $0x30] sm:$0xff]
        %v306 = vld [vmem:[%s291 + $0x38] sm:$0xff]
        %v307 = vld [vmem:[%s291 + $0x40] sm:$0xff]
        %v308 = vld [vmem:[%s291 + $0x48] sm:$0xff]
        %v309 = vld [vmem:[%s291 + $0x50] sm:$0xff]
        %v310 = vld [vmem:[%s291 + $0x58] sm:$0xff]
        %v311 = vld [vmem:[%s291 + $0x60] sm:$0xff]
        %v312 = vld [vmem:[%s291 + $0x68] sm:$0xff]
        %v313 = vld [vmem:[%s291 + $0x70] sm:$0xff]
        %v314 = vld [vmem:[%s291 + $0x78] sm:$0xff]
        %v315 = vld [vmem:[%s1] sm:$0xff]
        %v316 = vld [vmem:[%s2] sm:$0x1]
        %v318 = vperm.slane %v316, 0
        %vm320 = vcmask 64512
        %v322 = vsel %vm320, %v299, 0
        %v325 = vsel %vm320, %v300, 0
        %v328 = vsel %vm320, %v301, 0
        %v331 = vsel %vm320, %v302, 0
        %v334 = vsel %vm320, %v303, 0
        %v337 = vsel %vm320, %v304, 0
        %v340 = vsel %vm320, %v305, 0
        %v343 = vsel %vm320, %v306, 0
        %v346 = vsel %vm320, %v307, 0
        %v349 = vsel %vm320, %v308, 0
        %v352 = vsel %vm320, %v309, 0
        %v355 = vsel %vm320, %v310, 0
        %v358 = vsel %vm320, %v311, 0
        %v361 = vsel %vm320, %v312, 0
        %v364 = vsel %vm320, %v313, 0
        %v367 = vsel %vm320, %v314, 0
        %369 = vmatpush.msra.mxu0 0.0
        %370 = vmatpush.msra.mxu0 0.0
        %371 = vmatpush.msra.mxu0 0.0
        %372 = vmatpush.msra.mxu0 0.0
        %373 = vmatpush.msra.mxu0 0.0
        %374 = vmatpush.msra.mxu0 0.0
        %375 = vmatpush.msra.mxu0 0.0
        %376 = vmatpush.msra.mxu0 0.0
        %377 = vmatpush.msra.mxu0 0.0
        %378 = vmatpush.msra.mxu0 0.0
        %379 = vmatpush.msra.mxu0 0.0
        %380 = vmatpush.msra.mxu0 0.0
        %381 = vmatpush.msra.mxu0 0.0
        %382 = vmatpush.msra.mxu0 0.0
        %383 = vmatpush.msra.mxu0 0.0
        %384 = vmatpush.msra.mxu0 %v315
        %385 = vmatmul.f32.gmra.mxu0 %v322
        %v386 = vpop.f32.mrf.mxu0
        %v387 = vadd.f32 %v318, %v386
        %388 = vmatmul.f32.gmra.mxu0 %v325
        %v389 = vpop.f32.mrf.mxu0
        %v390 = vadd.f32 %v318, %v389
        %391 = vmatmul.f32.gmra.mxu0 %v328
        %v392 = vpop.f32.mrf.mxu0
        %v393 = vadd.f32 %v318, %v392
        %394 = vmatmul.f32.gmra.mxu0 %v331
        %v395 = vpop.f32.mrf.mxu0
        %v396 = vadd.f32 %v318, %v395
        %397 = vmatmul.f32.gmra.mxu0 %v334
        %v398 = vpop.f32.mrf.mxu0
        %v399 = vadd.f32 %v318, %v398
        %400 = vmatmul.f32.gmra.mxu0 %v337
        %v401 = vpop.f32.mrf.mxu0
        %v402 = vadd.f32 %v318, %v401
        %403 = vmatmul.f32.gmra.mxu0 %v340
        %v404 = vpop.f32.mrf.mxu0
        %v405 = vadd.f32 %v318, %v404
        %406 = vmatmul.f32.gmra.mxu0 %v343
        %v407 = vpop.f32.mrf.mxu0
        %v408 = vadd.f32 %v318, %v407
        %409 = vmatmul.f32.gmra.mxu0 %v346
        %v410 = vpop.f32.mrf.mxu0
        %v411 = vadd.f32 %v318, %v410
        %412 = vmatmul.f32.gmra.mxu0 %v349
        %v413 = vpop.f32.mrf.mxu0
        %v414 = vadd.f32 %v318, %v413
        %415 = vmatmul.f32.gmra.mxu0 %v352
        %v416 = vpop.f32.mrf.mxu0
        %v417 = vadd.f32 %v318, %v416
        %418 = vmatmul.f32.gmra.mxu0 %v355
        %v419 = vpop.f32.mrf.mxu0
        %v420 = vadd.f32 %v318, %v419
        %421 = vmatmul.f32.gmra.mxu0 %v358
        %v422 = vpop.f32.mrf.mxu0
        %v423 = vadd.f32 %v318, %v422
        %424 = vmatmul.f32.gmra.mxu0 %v361
        %v425 = vpop.f32.mrf.mxu0
        %v426 = vadd.f32 %v318, %v425
        %427 = vmatmul.f32.gmra.mxu0 %v364
        %v428 = vpop.f32.mrf.mxu0
        %v429 = vadd.f32 %v318, %v428
        %430 = vmatmul.f32.gmra.mxu0 %v367
        %v431 = vpop.f32.mrf.mxu0
        %v432 = vadd.f32 %v318, %v431
        %433 = vdwg.mxu0
        %v434 = vtanh.pop %v387
        %v435 = vtanh.pop %v390
        %v436 = vtanh.pop %v393
        %v437 = vtanh.pop %v396
        %v438 = vtanh.pop %v399
        %v439 = vtanh.pop %v402
        %v440 = vtanh.pop %v405
        %v441 = vtanh.pop %v408
        %v442 = vtanh.pop %v411
        %v443 = vtanh.pop %v414
        %v444 = vtanh.pop %v417
        %v445 = vtanh.pop %v420
        %v446 = vtanh.pop %v423
        %v447 = vtanh.pop %v426
        %v448 = vtanh.pop %v429
        %v449 = vtanh.pop %v432
        %v450 = vld [vmem:[#allocation2] sm:$0xff]
        %v451 = vld [vmem:[#allocation2 + $0x8] sm:$0xff]
        %v452 = vld [vmem:[#allocation2 + $0x10] sm:$0xff]
        %v453 = vld [vmem:[#allocation2 + $0x18] sm:$0xff]
        %v454 = vld [vmem:[#allocation2 + $0x20] sm:$0xff]
        %v455 = vld [vmem:[#allocation2 + $0x28] sm:$0xff]
        %v456 = vld [vmem:[#allocation2 + $0x30] sm:$0xff]
        %v457 = vld [vmem:[#allocation2 + $0x38] sm:$0xff]
        %v458 = vld [vmem:[#allocation2 + $0x40] sm:$0xff]
        %v459 = vld [vmem:[#allocation2 + $0x48] sm:$0xff]
        %v460 = vld [vmem:[#allocation2 + $0x50] sm:$0xff]
        %v461 = vld [vmem:[#allocation2 + $0x58] sm:$0xff]
        %v462 = vld [vmem:[#allocation2 + $0x60] sm:$0xff]
        %v463 = vld [vmem:[#allocation2 + $0x68] sm:$0xff]
        %v464 = vld [vmem:[#allocation2 + $0x70] sm:$0xff]
        %v465 = vld [vmem:[#allocation2 + $0x78] sm:$0xff]
        %v466 = vld [vmem:[%s4] sm:$0x1]
        %v468 = vperm.slane %v466, 0
        %470 = vmatpush.msra.mxu0 %v465
        %471 = vmatpush.msra.mxu0 %v464
        %472 = vmatpush.msra.mxu0 %v463
        %473 = vmatpush.msra.mxu0 %v462
        %474 = vmatpush.msra.mxu0 %v461
        %475 = vmatpush.msra.mxu0 %v460
        %476 = vmatpush.msra.mxu0 %v459
        %477 = vmatpush.msra.mxu0 %v458
        %478 = vmatpush.msra.mxu0 %v457
        %479 = vmatpush.msra.mxu0 %v456
        %480 = vmatpush.msra.mxu0 %v455
        %481 = vmatpush.msra.mxu0 %v454
        %482 = vmatpush.msra.mxu0 %v453
        %483 = vmatpush.msra.mxu0 %v452
        %484 = vmatpush.msra.mxu0 %v451
        %485 = vmatpush.msra.mxu0 %v450
        %486 = vmatmul.f32.gmra.mxu0 %v434
        %v487 = vpop.f32.mrf.mxu0
        %v488 = vadd.f32 %v468, %v487
        %489 = vmatmul.f32.gmra.mxu0 %v435
        %v490 = vpop.f32.mrf.mxu0
        %v491 = vadd.f32 %v468, %v490
        %492 = vmatmul.f32.gmra.mxu0 %v436
        %v493 = vpop.f32.mrf.mxu0
        %v494 = vadd.f32 %v468, %v493
        %495 = vmatmul.f32.gmra.mxu0 %v437
        %v496 = vpop.f32.mrf.mxu0
        %v497 = vadd.f32 %v468, %v496
        %498 = vmatmul.f32.gmra.mxu0 %v438
        %v499 = vpop.f32.mrf.mxu0
        %v500 = vadd.f32 %v468, %v499
        %501 = vmatmul.f32.gmra.mxu0 %v439
        %v502 = vpop.f32.mrf.mxu0
        %v503 = vadd.f32 %v468, %v502
        %504 = vmatmul.f32.gmra.mxu0 %v440
        %v505 = vpop.f32.mrf.mxu0
        %v506 = vadd.f32 %v468, %v505
        %507 = vmatmul.f32.gmra.mxu0 %v441
        %v508 = vpop.f32.mrf.mxu0
        %v509 = vadd.f32 %v468, %v508
        %510 = vmatmul.f32.gmra.mxu0 %v442
        %v511 = vpop.f32.mrf.mxu0
        %v512 = vadd.f32 %v468, %v511
        %513 = vmatmul.f32.gmra.mxu0 %v443
        %v514 = vpop.f32.mrf.mxu0
        %v515 = vadd.f32 %v468, %v514
        %516 = vmatmul.f32.gmra.mxu0 %v444
        %v517 = vpop.f32.mrf.mxu0
        %v518 = vadd.f32 %v468, %v517
        %519 = vmatmul.f32.gmra.mxu0 %v445
        %v520 = vpop.f32.mrf.mxu0
        %v521 = vadd.f32 %v468, %v520
        %522 = vmatmul.f32.gmra.mxu0 %v446
        %v523 = vpop.f32.mrf.mxu0
        %v524 = vadd.f32 %v468, %v523
        %525 = vmatmul.f32.gmra.mxu0 %v447
        %v526 = vpop.f32.mrf.mxu0
        %v527 = vadd.f32 %v468, %v526
        %528 = vmatmul.f32.gmra.mxu0 %v448
        %v529 = vpop.f32.mrf.mxu0
        %v530 = vadd.f32 %v468, %v529
        %531 = vmatmul.f32.gmra.mxu0 %v449
        %v532 = vpop.f32.mrf.mxu0
        %v533 = vadd.f32 %v468, %v532
        %534 = vdwg.mxu0
        %v535 = vtanh.pop %v488
        %v536 = vtanh.pop %v491
        %v537 = vtanh.pop %v494
        %v538 = vtanh.pop %v497
        %v539 = vtanh.pop %v500
        %v540 = vtanh.pop %v503
        %v541 = vtanh.pop %v506
        %v542 = vtanh.pop %v509
        %v543 = vtanh.pop %v512
        %v544 = vtanh.pop %v515
        %v545 = vtanh.pop %v518
        %v546 = vtanh.pop %v521
        %v547 = vtanh.pop %v524
        %v548 = vtanh.pop %v527
        %v549 = vtanh.pop %v530
        %v550 = vtanh.pop %v533
        %s551 = scalar_lea.vmem [#allocation2], 128
        %v552 = vld [vmem:[%s551] sm:$0xff]
        %v553 = vld [vmem:[%s551 + $0x8] sm:$0xff]
        %v554 = vld [vmem:[%s551 + $0x10] sm:$0xff]
        %v555 = vld [vmem:[%s551 + $0x18] sm:$0xff]
        %v556 = vld [vmem:[%s551 + $0x20] sm:$0xff]
        %v557 = vld [vmem:[%s551 + $0x28] sm:$0xff]
        %v558 = vld [vmem:[%s551 + $0x30] sm:$0xff]
        %v559 = vld [vmem:[%s551 + $0x38] sm:$0xff]
        %v560 = vld [vmem:[%s551 + $0x40] sm:$0xff]
        %v561 = vld [vmem:[%s551 + $0x48] sm:$0xff]
        %v562 = vld [vmem:[%s551 + $0x50] sm:$0xff]
        %v563 = vld [vmem:[%s551 + $0x58] sm:$0xff]
        %v564 = vld [vmem:[%s551 + $0x60] sm:$0xff]
        %v565 = vld [vmem:[%s551 + $0x68] sm:$0xff]
        %v566 = vld [vmem:[%s551 + $0x70] sm:$0xff]
        %v567 = vld [vmem:[%s551 + $0x78] sm:$0xff]
        %s568 = scalar_lea.vmem %s4, 1
        %v569 = vld [vmem:[%s568] sm:$0x1]
        %v571 = vperm.slane %v569, 0
        %573 = vmatpush.msra.mxu0 %v567
        %574 = vmatpush.msra.mxu0 %v566
        %575 = vmatpush.msra.mxu0 %v565
        %576 = vmatpush.msra.mxu0 %v564
        %577 = vmatpush.msra.mxu0 %v563
        %578 = vmatpush.msra.mxu0 %v562
        %579 = vmatpush.msra.mxu0 %v561
        %580 = vmatpush.msra.mxu0 %v560
        %581 = vmatpush.msra.mxu0 %v559
        %582 = vmatpush.msra.mxu0 %v558
        %583 = vmatpush.msra.mxu0 %v557
        %584 = vmatpush.msra.mxu0 %v556
        %585 = vmatpush.msra.mxu0 %v555
        %586 = vmatpush.msra.mxu0 %v554
        %587 = vmatpush.msra.mxu0 %v553
        %588 = vmatpush.msra.mxu0 %v552
        %589 = vmatmul.f32.gmra.mxu0 %v535
        %v590 = vpop.f32.mrf.mxu0
        %v591 = vadd.f32 %v571, %v590
        %592 = vmatmul.f32.gmra.mxu0 %v536
        %v593 = vpop.f32.mrf.mxu0
        %v594 = vadd.f32 %v571, %v593
        %595 = vmatmul.f32.gmra.mxu0 %v537
        %v596 = vpop.f32.mrf.mxu0
        %v597 = vadd.f32 %v571, %v596
        %598 = vmatmul.f32.gmra.mxu0 %v538
        %v599 = vpop.f32.mrf.mxu0
        %v600 = vadd.f32 %v571, %v599
        %601 = vmatmul.f32.gmra.mxu0 %v539
        %v602 = vpop.f32.mrf.mxu0
        %v603 = vadd.f32 %v571, %v602
        %604 = vmatmul.f32.gmra.mxu0 %v540
        %v605 = vpop.f32.mrf.mxu0
        %v606 = vadd.f32 %v571, %v605
        %607 = vmatmul.f32.gmra.mxu0 %v541
        %v608 = vpop.f32.mrf.mxu0
        %v609 = vadd.f32 %v571, %v608
        %610 = vmatmul.f32.gmra.mxu0 %v542
        %v611 = vpop.f32.mrf.mxu0
        %v612 = vadd.f32 %v571, %v611
        %613 = vmatmul.f32.gmra.mxu0 %v543
        %v614 = vpop.f32.mrf.mxu0
        %v615 = vadd.f32 %v571, %v614
        %616 = vmatmul.f32.gmra.mxu0 %v544
        %v617 = vpop.f32.mrf.mxu0
        %v618 = vadd.f32 %v571, %v617
        %619 = vmatmul.f32.gmra.mxu0 %v545
        %v620 = vpop.f32.mrf.mxu0
        %v621 = vadd.f32 %v571, %v620
        %622 = vmatmul.f32.gmra.mxu0 %v546
        %v623 = vpop.f32.mrf.mxu0
        %v624 = vadd.f32 %v571, %v623
        %625 = vmatmul.f32.gmra.mxu0 %v547
        %v626 = vpop.f32.mrf.mxu0
        %v627 = vadd.f32 %v571, %v626
        %628 = vmatmul.f32.gmra.mxu0 %v548
        %v629 = vpop.f32.mrf.mxu0
        %v630 = vadd.f32 %v571, %v629
        %631 = vmatmul.f32.gmra.mxu0 %v549
        %v632 = vpop.f32.mrf.mxu0
        %v633 = vadd.f32 %v571, %v632
        %634 = vmatmul.f32.gmra.mxu0 %v550
        %v635 = vpop.f32.mrf.mxu0
        %v636 = vadd.f32 %v571, %v635
        %637 = vdwg.mxu0
        %v638 = vadd.f32 %v591, %v434
        %v639 = vadd.f32 %v594, %v435
        %v640 = vadd.f32 %v597, %v436
        %v641 = vadd.f32 %v600, %v437
        %v642 = vadd.f32 %v603, %v438
        %v643 = vadd.f32 %v606, %v439
        %v644 = vadd.f32 %v609, %v440
        %v645 = vadd.f32 %v612, %v441
        %v646 = vadd.f32 %v615, %v442
        %v647 = vadd.f32 %v618, %v443
        %v648 = vadd.f32 %v621, %v444
        %v649 = vadd.f32 %v624, %v445
        %v650 = vadd.f32 %v627, %v446
        %v651 = vadd.f32 %v630, %v447
        %v652 = vadd.f32 %v633, %v448
        %v653 = vadd.f32 %v636, %v449
        %v654 = vtanh.pop %v638
        %v655 = vtanh.pop %v639
        %v656 = vtanh.pop %v640
        %v657 = vtanh.pop %v641
        %v658 = vtanh.pop %v642
        %v659 = vtanh.pop %v643
        %v660 = vtanh.pop %v644
        %v661 = vtanh.pop %v645
        %v662 = vtanh.pop %v646
        %v663 = vtanh.pop %v647
        %v664 = vtanh.pop %v648
        %v665 = vtanh.pop %v649
        %v666 = vtanh.pop %v650
        %v667 = vtanh.pop %v651
        %v668 = vtanh.pop %v652
        %v669 = vtanh.pop %v653
        %s670 = scalar_lea.vmem [#allocation2], 256
        %v671 = vld [vmem:[%s670] sm:$0xff]
        %v672 = vld [vmem:[%s670 + $0x8] sm:$0xff]
        %v673 = vld [vmem:[%s670 + $0x10] sm:$0xff]
        %v674 = vld [vmem:[%s670 + $0x18] sm:$0xff]
        %v675 = vld [vmem:[%s670 + $0x20] sm:$0xff]
        %v676 = vld [vmem:[%s670 + $0x28] sm:$0xff]
        %v677 = vld [vmem:[%s670 + $0x30] sm:$0xff]
        %v678 = vld [vmem:[%s670 + $0x38] sm:$0xff]
        %v679 = vld [vmem:[%s670 + $0x40] sm:$0xff]
        %v680 = vld [vmem:[%s670 + $0x48] sm:$0xff]
        %v681 = vld [vmem:[%s670 + $0x50] sm:$0xff]
        %v682 = vld [vmem:[%s670 + $0x58] sm:$0xff]
        %v683 = vld [vmem:[%s670 + $0x60] sm:$0xff]
        %v684 = vld [vmem:[%s670 + $0x68] sm:$0xff]
        %v685 = vld [vmem:[%s670 + $0x70] sm:$0xff]
        %v686 = vld [vmem:[%s670 + $0x78] sm:$0xff]
        %s687 = scalar_lea.vmem %s4, 2
        %v688 = vld [vmem:[%s687] sm:$0x1]
        %v690 = vperm.slane %v688, 0
        %692 = vmatpush.msra.mxu0 %v686
        %693 = vmatpush.msra.mxu0 %v685
        %694 = vmatpush.msra.mxu0 %v684
        %695 = vmatpush.msra.mxu0 %v683
        %696 = vmatpush.msra.mxu0 %v682
        %697 = vmatpush.msra.mxu0 %v681
        %698 = vmatpush.msra.mxu0 %v680
        %699 = vmatpush.msra.mxu0 %v679
        %700 = vmatpush.msra.mxu0 %v678
        %701 = vmatpush.msra.mxu0 %v677
        %702 = vmatpush.msra.mxu0 %v676
        %703 = vmatpush.msra.mxu0 %v675
        %704 = vmatpush.msra.mxu0 %v674
        %705 = vmatpush.msra.mxu0 %v673
        %706 = vmatpush.msra.mxu0 %v672
        %707 = vmatpush.msra.mxu0 %v671
        %708 = vmatmul.f32.gmra.mxu0 %v654
        %v709 = vpop.f32.mrf.mxu0
        %v710 = vadd.f32 %v690, %v709
        %711 = vmatmul.f32.gmra.mxu0 %v655
        %v712 = vpop.f32.mrf.mxu0
        %v713 = vadd.f32 %v690, %v712
        %714 = vmatmul.f32.gmra.mxu0 %v656
        %v715 = vpop.f32.mrf.mxu0
        %v716 = vadd.f32 %v690, %v715
        %717 = vmatmul.f32.gmra.mxu0 %v657
        %v718 = vpop.f32.mrf.mxu0
        %v719 = vadd.f32 %v690, %v718
        %720 = vmatmul.f32.gmra.mxu0 %v658
        %v721 = vpop.f32.mrf.mxu0
        %v722 = vadd.f32 %v690, %v721
        %723 = vmatmul.f32.gmra.mxu0 %v659
        %v724 = vpop.f32.mrf.mxu0
        %v725 = vadd.f32 %v690, %v724
        %726 = vmatmul.f32.gmra.mxu0 %v660
        %v727 = vpop.f32.mrf.mxu0
        %v728 = vadd.f32 %v690, %v727
        %729 = vmatmul.f32.gmra.mxu0 %v661
        %v730 = vpop.f32.mrf.mxu0
        %v731 = vadd.f32 %v690, %v730
        %732 = vmatmul.f32.gmra.mxu0 %v662
        %v733 = vpop.f32.mrf.mxu0
        %v734 = vadd.f32 %v690, %v733
        %735 = vmatmul.f32.gmra.mxu0 %v663
        %v736 = vpop.f32.mrf.mxu0
        %v737 = vadd.f32 %v690, %v736
        %738 = vmatmul.f32.gmra.mxu0 %v664
        %v739 = vpop.f32.mrf.mxu0
        %v740 = vadd.f32 %v690, %v739
        %741 = vmatmul.f32.gmra.mxu0 %v665
        %v742 = vpop.f32.mrf.mxu0
        %v743 = vadd.f32 %v690, %v742
        %744 = vmatmul.f32.gmra.mxu0 %v666
        %v745 = vpop.f32.mrf.mxu0
        %v746 = vadd.f32 %v690, %v745
        %747 = vmatmul.f32.gmra.mxu0 %v667
        %v748 = vpop.f32.mrf.mxu0
        %v749 = vadd.f32 %v690, %v748
        %750 = vmatmul.f32.gmra.mxu0 %v668
        %v751 = vpop.f32.mrf.mxu0
        %v752 = vadd.f32 %v690, %v751
        %753 = vmatmul.f32.gmra.mxu0 %v669
        %v754 = vpop.f32.mrf.mxu0
        %v755 = vadd.f32 %v690, %v754
        %756 = vdwg.mxu0
        %v757 = vtanh.pop %v710
        %v758 = vtanh.pop %v713
        %v759 = vtanh.pop %v716
        %v760 = vtanh.pop %v719
        %v761 = vtanh.pop %v722
        %v762 = vtanh.pop %v725
        %v763 = vtanh.pop %v728
        %v764 = vtanh.pop %v731
        %v765 = vtanh.pop %v734
        %v766 = vtanh.pop %v737
        %v767 = vtanh.pop %v740
        %v768 = vtanh.pop %v743
        %v769 = vtanh.pop %v746
        %v770 = vtanh.pop %v749
        %v771 = vtanh.pop %v752
        %v772 = vtanh.pop %v755
        %s773 = scalar_lea.vmem [#allocation2], 384
        %v774 = vld [vmem:[%s773] sm:$0xff]
        %v775 = vld [vmem:[%s773 + $0x8] sm:$0xff]
        %v776 = vld [vmem:[%s773 + $0x10] sm:$0xff]
        %v777 = vld [vmem:[%s773 + $0x18] sm:$0xff]
        %v778 = vld [vmem:[%s773 + $0x20] sm:$0xff]
        %v779 = vld [vmem:[%s773 + $0x28] sm:$0xff]
        %v780 = vld [vmem:[%s773 + $0x30] sm:$0xff]
        %v781 = vld [vmem:[%s773 + $0x38] sm:$0xff]
        %v782 = vld [vmem:[%s773 + $0x40] sm:$0xff]
        %v783 = vld [vmem:[%s773 + $0x48] sm:$0xff]
        %v784 = vld [vmem:[%s773 + $0x50] sm:$0xff]
        %v785 = vld [vmem:[%s773 + $0x58] sm:$0xff]
        %v786 = vld [vmem:[%s773 + $0x60] sm:$0xff]
        %v787 = vld [vmem:[%s773 + $0x68] sm:$0xff]
        %v788 = vld [vmem:[%s773 + $0x70] sm:$0xff]
        %v789 = vld [vmem:[%s773 + $0x78] sm:$0xff]
        %s790 = scalar_lea.vmem %s4, 3
        %v791 = vld [vmem:[%s790] sm:$0x1]
        %v793 = vperm.slane %v791, 0
        %795 = vmatpush.msra.mxu0 %v789
        %796 = vmatpush.msra.mxu0 %v788
        %797 = vmatpush.msra.mxu0 %v787
        %798 = vmatpush.msra.mxu0 %v786
        %799 = vmatpush.msra.mxu0 %v785
        %800 = vmatpush.msra.mxu0 %v784
        %801 = vmatpush.msra.mxu0 %v783
        %802 = vmatpush.msra.mxu0 %v782
        %803 = vmatpush.msra.mxu0 %v781
        %804 = vmatpush.msra.mxu0 %v780
        %805 = vmatpush.msra.mxu0 %v779
        %806 = vmatpush.msra.mxu0 %v778
        %807 = vmatpush.msra.mxu0 %v777
        %808 = vmatpush.msra.mxu0 %v776
        %809 = vmatpush.msra.mxu0 %v775
        %810 = vmatpush.msra.mxu0 %v774
        %811 = vmatmul.f32.gmra.mxu0 %v757
        %v812 = vpop.f32.mrf.mxu0
        %v813 = vadd.f32 %v793, %v812
        %814 = vmatmul.f32.gmra.mxu0 %v758
        %v815 = vpop.f32.mrf.mxu0
        %v816 = vadd.f32 %v793, %v815
        %817 = vmatmul.f32.gmra.mxu0 %v759
        %v818 = vpop.f32.mrf.mxu0
        %v819 = vadd.f32 %v793, %v818
        %820 = vmatmul.f32.gmra.mxu0 %v760
        %v821 = vpop.f32.mrf.mxu0
        %v822 = vadd.f32 %v793, %v821
        %823 = vmatmul.f32.gmra.mxu0 %v761
        %v824 = vpop.f32.mrf.mxu0
        %v825 = vadd.f32 %v793, %v824
        %826 = vmatmul.f32.gmra.mxu0 %v762
        %v827 = vpop.f32.mrf.mxu0
        %v828 = vadd.f32 %v793, %v827
        %829 = vmatmul.f32.gmra.mxu0 %v763
        %v830 = vpop.f32.mrf.mxu0
        %v831 = vadd.f32 %v793, %v830
        %832 = vmatmul.f32.gmra.mxu0 %v764
        %v833 = vpop.f32.mrf.mxu0
        %v834 = vadd.f32 %v793, %v833
        %835 = vmatmul.f32.gmra.mxu0 %v765
        %v836 = vpop.f32.mrf.mxu0
        %v837 = vadd.f32 %v793, %v836
        %838 = vmatmul.f32.gmra.mxu0 %v766
        %v839 = vpop.f32.mrf.mxu0
        %v840 = vadd.f32 %v793, %v839
        %841 = vmatmul.f32.gmra.mxu0 %v767
        %v842 = vpop.f32.mrf.mxu0
        %v843 = vadd.f32 %v793, %v842
        %844 = vmatmul.f32.gmra.mxu0 %v768
        %v845 = vpop.f32.mrf.mxu0
        %v846 = vadd.f32 %v793, %v845
        %847 = vmatmul.f32.gmra.mxu0 %v769
        %v848 = vpop.f32.mrf.mxu0
        %v849 = vadd.f32 %v793, %v848
        %850 = vmatmul.f32.gmra.mxu0 %v770
        %v851 = vpop.f32.mrf.mxu0
        %v852 = vadd.f32 %v793, %v851
        %853 = vmatmul.f32.gmra.mxu0 %v771
        %v854 = vpop.f32.mrf.mxu0
        %v855 = vadd.f32 %v793, %v854
        %856 = vmatmul.f32.gmra.mxu0 %v772
        %v857 = vpop.f32.mrf.mxu0
        %v858 = vadd.f32 %v793, %v857
        %859 = vdwg.mxu0
        %v860 = vadd.f32 %v813, %v654
        %v861 = vadd.f32 %v816, %v655
        %v862 = vadd.f32 %v819, %v656
        %v863 = vadd.f32 %v822, %v657
        %v864 = vadd.f32 %v825, %v658
        %v865 = vadd.f32 %v828, %v659
        %v866 = vadd.f32 %v831, %v660
        %v867 = vadd.f32 %v834, %v661
        %v868 = vadd.f32 %v837, %v662
        %v869 = vadd.f32 %v840, %v663
        %v870 = vadd.f32 %v843, %v664
        %v871 = vadd.f32 %v846, %v665
        %v872 = vadd.f32 %v849, %v666
        %v873 = vadd.f32 %v852, %v667
        %v874 = vadd.f32 %v855, %v668
        %v875 = vadd.f32 %v858, %v669
        %v876 = vtanh.pop %v860
        %v877 = vtanh.pop %v861
        %v878 = vtanh.pop %v862
        %v879 = vtanh.pop %v863
        %v880 = vtanh.pop %v864
        %v881 = vtanh.pop %v865
        %v882 = vtanh.pop %v866
        %v883 = vtanh.pop %v867
        %v884 = vtanh.pop %v868
        %v885 = vtanh.pop %v869
        %v886 = vtanh.pop %v870
        %v887 = vtanh.pop %v871
        %v888 = vtanh.pop %v872
        %v889 = vtanh.pop %v873
        %v890 = vtanh.pop %v874
        %v891 = vtanh.pop %v875
        %v892 = vld [vmem:[%s5] sm:$0xff]
        %v893 = vld [vmem:[%s5 + $0x8] sm:$0xff]
        %v894 = vld [vmem:[%s5 + $0x10] sm:$0xff]
        %v895 = vld [vmem:[%s5 + $0x18] sm:$0xff]
        %v896 = vld [vmem:[%s5 + $0x20] sm:$0xff]
        %v897 = vld [vmem:[%s5 + $0x28] sm:$0xff]
        %v898 = vld [vmem:[%s5 + $0x30] sm:$0xff]
        %v899 = vld [vmem:[%s5 + $0x38] sm:$0xff]
        %v900 = vld [vmem:[%s5 + $0x40] sm:$0xff]
        %v901 = vld [vmem:[%s5 + $0x48] sm:$0xff]
        %v902 = vld [vmem:[%s5 + $0x50] sm:$0xff]
        %v903 = vld [vmem:[%s5 + $0x58] sm:$0xff]
        %v904 = vld [vmem:[%s5 + $0x60] sm:$0xff]
        %v905 = vld [vmem:[%s5 + $0x68] sm:$0xff]
        %v906 = vld [vmem:[%s5 + $0x70] sm:$0xff]
        %v907 = vld [vmem:[%s5 + $0x78] sm:$0xff]
        %v908 = vld [vmem:[%s6] sm:$0x1]
        %v910 = vperm.slane %v908, 0
        %912 = vmatpush.msra.mxu0 %v907
        %913 = vmatpush.msra.mxu0 %v906
        %914 = vmatpush.msra.mxu0 %v905
        %915 = vmatpush.msra.mxu0 %v904
        %916 = vmatpush.msra.mxu0 %v903
        %917 = vmatpush.msra.mxu0 %v902
        %918 = vmatpush.msra.mxu0 %v901
        %919 = vmatpush.msra.mxu0 %v900
        %920 = vmatpush.msra.mxu0 %v899
        %921 = vmatpush.msra.mxu0 %v898
        %922 = vmatpush.msra.mxu0 %v897
        %923 = vmatpush.msra.mxu0 %v896
        %924 = vmatpush.msra.mxu0 %v895
        %925 = vmatpush.msra.mxu0 %v894
        %926 = vmatpush.msra.mxu0 %v893
        %927 = vmatpush.msra.mxu0 %v892
        %928 = vmatmul.f32.gmra.mxu0 %v876
        %v929 = vpop.f32.mrf.mxu0
        %v930 = vadd.f32 %v910, %v929
        %931 = vmatmul.f32.gmra.mxu0 %v877
        %v932 = vpop.f32.mrf.mxu0
        %v933 = vadd.f32 %v910, %v932
        %934 = vmatmul.f32.gmra.mxu0 %v878
        %v935 = vpop.f32.mrf.mxu0
        %v936 = vadd.f32 %v910, %v935
        %937 = vmatmul.f32.gmra.mxu0 %v879
        %v938 = vpop.f32.mrf.mxu0
        %v939 = vadd.f32 %v910, %v938
        %940 = vmatmul.f32.gmra.mxu0 %v880
        %v941 = vpop.f32.mrf.mxu0
        %v942 = vadd.f32 %v910, %v941
        %943 = vmatmul.f32.gmra.mxu0 %v881
        %v944 = vpop.f32.mrf.mxu0
        %v945 = vadd.f32 %v910, %v944
        %946 = vmatmul.f32.gmra.mxu0 %v882
        %v947 = vpop.f32.mrf.mxu0
        %v948 = vadd.f32 %v910, %v947
        %949 = vmatmul.f32.gmra.mxu0 %v883
        %v950 = vpop.f32.mrf.mxu0
        %v951 = vadd.f32 %v910, %v950
        %952 = vmatmul.f32.gmra.mxu0 %v884
        %v953 = vpop.f32.mrf.mxu0
        %v954 = vadd.f32 %v910, %v953
        %955 = vmatmul.f32.gmra.mxu0 %v885
        %v956 = vpop.f32.mrf.mxu0
        %v957 = vadd.f32 %v910, %v956
        %958 = vmatmul.f32.gmra.mxu0 %v886
        %v959 = vpop.f32.mrf.mxu0
        %v960 = vadd.f32 %v910, %v959
        %961 = vmatmul.f32.gmra.mxu0 %v887
        %v962 = vpop.f32.mrf.mxu0
        %v963 = vadd.f32 %v910, %v962
        %964 = vmatmul.f32.gmra.mxu0 %v888
        %v965 = vpop.f32.mrf.mxu0
        %v966 = vadd.f32 %v910, %v965
        %967 = vmatmul.f32.gmra.mxu0 %v889
        %v968 = vpop.f32.mrf.mxu0
        %v969 = vadd.f32 %v910, %v968
        %970 = vmatmul.f32.gmra.mxu0 %v890
        %v971 = vpop.f32.mrf.mxu0
        %v972 = vadd.f32 %v910, %v971
        %973 = vmatmul.f32.gmra.mxu0 %v891
        %v974 = vpop.f32.mrf.mxu0
        %v975 = vadd.f32 %v910, %v974
        %976 = vdwg.mxu0
        %977 = vst.msk [vmem:[%s297] sm:$0xff] %vm320, %v930
        %978 = vst.msk [vmem:[%s297 + $0x8] sm:$0xff] %vm320, %v933
        %979 = vst.msk [vmem:[%s297 + $0x10] sm:$0xff] %vm320, %v936
        %980 = vst.msk [vmem:[%s297 + $0x18] sm:$0xff] %vm320, %v939
        %981 = vst.msk [vmem:[%s297 + $0x20] sm:$0xff] %vm320, %v942
        %982 = vst.msk [vmem:[%s297 + $0x28] sm:$0xff] %vm320, %v945
        %983 = vst.msk [vmem:[%s297 + $0x30] sm:$0xff] %vm320, %v948
        %984 = vst.msk [vmem:[%s297 + $0x38] sm:$0xff] %vm320, %v951
        %985 = vst.msk [vmem:[%s297 + $0x40] sm:$0xff] %vm320, %v954
        %986 = vst.msk [vmem:[%s297 + $0x48] sm:$0xff] %vm320, %v957
        %987 = vst.msk [vmem:[%s297 + $0x50] sm:$0xff] %vm320, %v960
        %988 = vst.msk [vmem:[%s297 + $0x58] sm:$0xff] %vm320, %v963
        %989 = vst.msk [vmem:[%s297 + $0x60] sm:$0xff] %vm320, %v966
        %990 = vst.msk [vmem:[%s297 + $0x68] sm:$0xff] %vm320, %v969
        %991 = vst.msk [vmem:[%s297 + $0x70] sm:$0xff] %vm320, %v972
        %992 = vst.msk [vmem:[%s297 + $0x78] sm:$0xff] %vm320, %v975
        %s993 = smul.u32 16, %s19
        %p994 = scmp.lt.s32.totalorder %s993, 31
        %s995 = scalar_select %p994, %s993, 31
        %s996 = smul.addr %s995, 8
        %s997 = scalar_lea.vmem %s7, %s996
        // Predicated region
        $region53: #{tpu_custom_call.1} parent=47 // pred_check
          %p998 = pneg %p189
        $region54: #{tpu_custom_call.1} parent=47 // pred_check_branch
          %1000 = sbr.rel (%p998) target = $region56
        $region55: #{tpu_custom_call.1} parent=47 // pred_region
          %s1001 = smul.u32 16, %s19
        $region56: #{tpu_custom_call.1} parent=47 // pred_fallthru
          _
      $region48: #{tpu_custom_call.1} parent=5 // pred_fallthru
        _
      %p1002 = scmp.le.s32.totalorder 2, %s14
      // Predicated region
      $region57: #{tpu_custom_call.1} parent=5 // pred_check
        %p1003 = pneg %p1002
      $region58: #{tpu_custom_call.1} parent=5 // pred_check_branch
        %1005 = sbr.rel (%p1003) target = $region60
      $region59: #{tpu_custom_call.1} parent=5 // pred_region
        %s1006 = ssub.s32 %s14, 2
        // Predicated region
        $region61: #{tpu_custom_call.1} parent=59 // pred_check
          %p1007 = pneg %p195
        $region62: #{tpu_custom_call.1} parent=59 // pred_check_branch
          %1009 = sbr.rel (%p1007) target = $region64
        $region63: #{tpu_custom_call.1} parent=59 // pred_region
          %s1010 = smul.u32 16, %s20
          %p1011 = scmp.lt.s32.totalorder %s1010, 31
          %s1012 = scalar_select %p1011, %s1010, 31
          %s1013 = smul.addr %s1012, 8
          %s1014 = scalar_lea.vmem %s7, %s1013
        $region64: #{tpu_custom_call.1} parent=59 // pred_fallthru
          _
      $region60: #{tpu_custom_call.1} parent=5 // pred_fallthru
        _
    $region6: #{tpu_custom_call.1} parent=1 // loop_footer
      %s18 = sadd.s32 1, %s14
    $region7: #{tpu_custom_call.1} parent=1 // loop_footer_branch
      %13 = sbr.rel target = $region3
    $region8: #{tpu_custom_call.1} parent=1 // loop_exit
      _
    %1015 = vsyncpa [#allocation3], 1
    %s1016 = scalar_lea.sflag [#allocation3], 1
    %1017 = vsyncpa %s1016, 1

</llo_original>
